<compile_context>
chip_gen: v6e
topology: v6e:2x2x1
jax: 0.10.0
libtpu: 0.0.40
codegen_flags: <defaults>
</compile_context>

<pallas_src>
import functools

import jax
import jax.numpy as jnp
from jax.experimental import pallas as pl
from jax.experimental.pallas import tpu as pltpu

_LANE = 128
_SUBLANE = 8


def _round_up(x, m):
    return (x + m - 1) // m * m


# --------------------------------------------------------------------------- kernels
def _aggregate_kernel_folded(va_ref, vb_ref, w1a_ref, w1b_ref, b1_ref,
                             w2_ref, b2_ref, w3_ref, b3_ref, out_ref):
    """Lane-dense path: inputs are (bm, S*F); the seq-sum is folded into W1 (tiled)."""
    cdt = w1a_ref.dtype                               # MXU input dtype

    h1 = (jnp.dot(va_ref[...], w1a_ref[...], preferred_element_type=jnp.float32)
          + jnp.dot(vb_ref[...], w1b_ref[...], preferred_element_type=jnp.float32)
          + b1_ref[...])
    h1 = jnp.maximum(h1, 0.0)                         # ReLU (f32)

    h2 = jnp.dot(h1.astype(cdt), w2_ref[...],
                 preferred_element_type=jnp.float32) + b2_ref[...]
    h2 = jnp.maximum(h2, 0.0)                         # ReLU (f32)

    y = jnp.dot(h2.astype(cdt), w3_ref[...],
                preferred_element_type=jnp.float32) + b3_ref[...]
    out_ref[...] = y.astype(out_ref.dtype)


def _aggregate_kernel_summed(va_ref, vb_ref, w1a_ref, w1b_ref, b1_ref,
                             w2_ref, b2_ref, w3_ref, b3_ref, out_ref):
    """Fallback path (F already a multiple of 128): seq-sum done in-kernel in f32."""
    cdt = w1a_ref.dtype

    va = va_ref[...].astype(jnp.float32).sum(axis=1).astype(cdt)   # (bm, F)
    vb = vb_ref[...].astype(jnp.float32).sum(axis=1).astype(cdt)   # (bm, F)

    h1 = (jnp.dot(va, w1a_ref[...], preferred_element_type=jnp.float32)
          + jnp.dot(vb, w1b_ref[...], preferred_element_type=jnp.float32)
          + b1_ref[...])
    h1 = jnp.maximum(h1, 0.0)

    h2 = jnp.dot(h1.astype(cdt), w2_ref[...],
                 preferred_element_type=jnp.float32) + b2_ref[...]
    h2 = jnp.maximum(h2, 0.0)

    y = jnp.dot(h2.astype(cdt), w3_ref[...],
                preferred_element_type=jnp.float32) + b3_ref[...]
    out_ref[...] = y.astype(out_ref.dtype)


# --------------------------------------------------------------------- tile planning
def _vmem_plan():
    """(planning budget, vmem_limit_bytes) per TPU generation; conservative fallback."""
    kind = ""
    try:
        kind = jax.devices()[0].device_kind.lower()
    except Exception:
        pass
    if "v2" in kind or "v3" in kind:
        return 10 << 20, 14 << 20          # tiny VMEM generations
    if "v5" in kind or "v6" in kind:
        return 56 << 20, 80 << 20          # 128 MiB physical VMEM
    return 26 << 20, 44 << 20              # v7x (64 MiB / TC) or unknown: conservative


def _pick_batch_tile(B, bytes_per_row, resident_bytes, budget_bytes):
    """Biggest 128-aligned batch tile whose working set fits the VMEM budget."""
    if B < _SUBLANE:
        return B                           # tiny batch: one full-extent tile
    avail = max(budget_bytes - resident_bytes, 2 << 20)
    bm = int(avail // max(bytes_per_row, 1))
    if bm >= B:
        # Whole batch fits one tile.  Keep >=2 (128-aligned) grid steps when the
        # batch is large enough so both v7x TensorCores get work.
        return _round_up(pl.cdiv(B, 2), _LANE) if B >= 2 * _LANE else B
    if bm >= _LANE:
        return (bm // _LANE) * _LANE       # full MXU M rows, unmasked whole-vreg stores
    return max(_SUBLANE, (bm // _SUBLANE) * _SUBLANE)


# ---------------------------------------------------------------------------- wrapper
@functools.partial(jax.jit, static_argnames=("compute_dtype", "out_dtype"))
def aggregate_forward(V_A, V_B, params, *, compute_dtype=jnp.bfloat16, out_dtype=None):
    """V_A, V_B: (B, S, F). params: W1 (2F,H), W2 (H,H), W3 (H,O), biases (1,out).

    compute_dtype=bf16 is the fast (bandwidth-bound) path; accumulation, bias-add and
    ReLU stay in f32.  Pass compute_dtype=jnp.float32 for bit-faithful numerics.
    """
    if out_dtype is None:
        out_dtype = compute_dtype
    B, S, F = V_A.shape
    H = params["W1"].shape[1]
    O = params["W3"].shape[1]

    H_pad = _round_up(H, _LANE)
    n_pad = _round_up(max(O, 1), _LANE)
    in_itemsize = jnp.dtype(compute_dtype).itemsize
    out_itemsize = jnp.dtype(out_dtype).itemsize

    # --- wrapper-side weight prep (pure layout plumbing, traced once under jit) ----
    def pad_cast(a, rows, cols, dt):
        return jnp.zeros((rows, cols), dt).at[:a.shape[0], :a.shape[1]].set(a.astype(dt))

    W1a = params["W1"][:F]                              # split so kernel never slices
    W1b = params["W1"][F:]
    # Pad hidden/output dims to 128: padded units are exactly 0 through bias+ReLU.
    W1a_p = pad_cast(W1a, F, H_pad, compute_dtype)
    W1b_p = pad_cast(W1b, F, H_pad, compute_dtype)
    W2_p = pad_cast(params["W2"], H_pad, H_pad, compute_dtype)
    W3_p = pad_cast(params["W3"], H_pad, n_pad, compute_dtype)
    b1_p = pad_cast(params["b1"], 1, H_pad, jnp.float32)
    b2_p = pad_cast(params["b2"], 1, H_pad, jnp.float32)
    b3_p = pad_cast(params["b3"], 1, n_pad, jnp.float32)

    fold_seq = (F % _LANE) != 0        # F lane-sparse -> fold seq-sum into layer-1 matmul
    if fold_seq:
        K = S * F
        Va = V_A.reshape(B, K).astype(compute_dtype)    # lane-dense activation stream
        Vb = V_B.reshape(B, K).astype(compute_dtype)
        # sum over s folds into the contraction: tile W1a/W1b vertically S times
        W1a_k = jnp.tile(W1a_p, (S, 1))                 # (S*F, H_pad)
        W1b_k = jnp.tile(W1b_p, (S, 1))
        kernel = _aggregate_kernel_folded
        in_row_bytes = 2 * 2 * _round_up(K, _LANE) * in_itemsize
        l1_flops = 2 * 2 * B * K * H_pad
    else:
        K = F
        Va = V_A.astype(compute_dtype)
        Vb = V_B.astype(compute_dtype)
        W1a_k, W1b_k = W1a_p, W1b_p
        kernel = _aggregate_kernel_summed
        in_row_bytes = 2 * 2 * _round_up(S, 16) * _round_up(F, _LANE) * in_itemsize
        l1_flops = 2 * B * S * F + 2 * 2 * B * F * H_pad

    # --- VMEM accounting / batch tile ----------------------------------------------
    budget, vmem_limit = _vmem_plan()
    # Weights/biases have constant index_maps (DMA'd once) but still get the default
    # 2 pipeline buffers each -> count them twice.
    resident = 2 * ((W1a_k.size + W1b_k.size + W2_p.size + W3_p.size) * in_itemsize
                    + (b1_p.size + b2_p.size + b3_p.size) * 4)
    row_bytes = in_row_bytes + 2 * n_pad * out_itemsize          # dbl-buffered in + out
    bm = _pick_batch_tile(B, row_bytes, resident, budget)
    nb = pl.cdiv(B, bm)

    flops = l1_flops + 2 * B * H_pad * H_pad + 2 * B * H_pad * n_pad
    bytes_accessed = ((Va.size + Vb.size) * in_itemsize + resident // 2
                      + B * n_pad * out_itemsize)

    if fold_seq:
        in_blocks = [pl.BlockSpec((bm, K), lambda i: (i, 0)),
                     pl.BlockSpec((bm, K), lambda i: (i, 0))]
    else:
        in_blocks = [pl.BlockSpec((bm, S, F), lambda i: (i, 0, 0)),
                     pl.BlockSpec((bm, S, F), lambda i: (i, 0, 0))]

    grid_spec = pltpu.PrefetchScalarGridSpec(
        num_scalar_prefetch=0,
        grid=(nb,),
        in_specs=in_blocks + [
            # Weights/biases: constant index_map -> resident, DMA'd once.
            pl.BlockSpec(W1a_k.shape, lambda i: (0, 0)),
            pl.BlockSpec(W1b_k.shape, lambda i: (0, 0)),
            pl.BlockSpec(b1_p.shape, lambda i: (0, 0)),
            pl.BlockSpec(W2_p.shape, lambda i: (0, 0)),
            pl.BlockSpec(b2_p.shape, lambda i: (0, 0)),
            pl.BlockSpec(W3_p.shape, lambda i: (0, 0)),
            pl.BlockSpec(b3_p.shape, lambda i: (0, 0)),
        ],
        out_specs=pl.BlockSpec((bm, n_pad), lambda i: (i, 0)),
    )

    y_padded = pl.pallas_call(
        kernel,
        out_shape=jax.ShapeDtypeStruct((B, n_pad), out_dtype),
        grid_spec=grid_spec,
        compiler_params=pltpu.CompilerParams(
            dimension_semantics=("parallel",),
            vmem_limit_bytes=int(vmem_limit)),
        cost_estimate=pl.CostEstimate(
            flops=int(flops), transcendentals=0,
            bytes_accessed=int(bytes_accessed)),
    )(Va, Vb, W1a_k, W1b_k, b1_p, W2_p, b2_p, W3_p, b3_p)

    # NOTE: for tiny num_outputs, fuse this slice into the consumer to avoid an extra
    # HBM pass over the padded slab.
    return y_padded[:, :O]


# -------------------------------------------------------------------------- utilities
def make_params(key, num_inputs, num_hiddens, num_outputs):
    ks = jax.random.split(key, 6)
    scale = 0.05
    return {
        # weights stored as (in, out); biases as (1, out) for clean TPU layout
        "W1": scale * jax.random.normal(ks[0], (num_inputs, num_hiddens), jnp.float32),
        "b1": scale * jax.random.normal(ks[1], (1, num_hiddens), jnp.float32),
        "W2": scale * jax.random.normal(ks[2], (num_hiddens, num_hiddens), jnp.float32),
        "b2": scale * jax.random.normal(ks[3], (1, num_hiddens), jnp.float32),
        "W3": scale * jax.random.normal(ks[4], (num_hiddens, num_outputs), jnp.float32),
        "b3": scale * jax.random.normal(ks[5], (1, num_outputs), jnp.float32),
    }


def reference_forward(V_A, V_B, p):
    va = V_A.sum(axis=1)
    vb = V_B.sum(axis=1)
    x = jnp.concatenate([va, vb], axis=1)
    h1 = jnp.maximum(x @ p["W1"] + p["b1"], 0.0)
    h2 = jnp.maximum(h1 @ p["W2"] + p["b2"], 0.0)
    return h2 @ p["W3"] + p["b3"]


if __name__ == "__main__":
    key = jax.random.PRNGKey(0)
    k_a, k_b, k_p = jax.random.split(key, 3)

    batch, seq, feat = 2, 8, 16            # per-sentence token embeddings
    num_inputs = 2 * feat                  # concat of the two summed vectors
    num_hiddens = 32
    num_outputs = 4

    V_A = jax.random.normal(k_a, (batch, seq, feat), jnp.float32)
    V_B = jax.random.normal(k_b, (batch, seq, feat), jnp.float32)
    params = make_params(k_p, num_inputs, num_hiddens, num_outputs)

    y_ref = reference_forward(V_A, V_B, params)

    # Exact path (f32 streams, f32 accumulation): matches the reference up to
    # accumulation order.
    y_f32 = aggregate_forward(V_A, V_B, params, compute_dtype=jnp.float32)
    jax.block_until_ready(y_f32)
    assert y_f32.shape == (batch, num_outputs)
    assert jnp.allclose(y_f32, y_ref, atol=1e-4, rtol=1e-4), "f32 mismatch vs reference"

    # Fast path (default): bf16 activation/weight streams, f32 accumulation.
    y_bf16 = aggregate_forward(V_A, V_B, params)
    jax.block_until_ready(y_bf16)
    assert y_bf16.shape == (batch, num_outputs)
    assert jnp.allclose(y_bf16.astype(jnp.float32), y_ref, atol=1e-1, rtol=1e-1), \
        "bf16 mismatch vs reference"

    print("KERNEL_OK")
</pallas_src>

<mosaic_0001>
module attributes {stable_mosaic.version = 11 : i64} {
  func.func @_aggregate_kernel_folded(%arg0: i32, %arg1: memref<2x128xf32, #tpu.memory_space<vmem>>, %arg2: memref<2x128xf32, #tpu.memory_space<vmem>>, %arg3: memref<128x128xf32, #tpu.memory_space<vmem>>, %arg4: memref<128x128xf32, #tpu.memory_space<vmem>>, %arg5: memref<1x128xf32, #tpu.memory_space<vmem>>, %arg6: memref<128x128xf32, #tpu.memory_space<vmem>>, %arg7: memref<1x128xf32, #tpu.memory_space<vmem>>, %arg8: memref<128x128xf32, #tpu.memory_space<vmem>>, %arg9: memref<1x128xf32, #tpu.memory_space<vmem>>, %arg10: memref<2x128xf32, #tpu.memory_space<vmem>>) attributes {dimension_semantics = [#tpu.dimension_semantics<parallel>], iteration_bounds = array<i64: 1>, scalar_prefetch = 0 : i64, scratch_operands = 0 : i64, tpu.core_type = #tpu.core_type<tc>, window_params = [{transform_indices = @transform_0, window_bounds = array<i64: 2, 128>}, {transform_indices = @transform_1, window_bounds = array<i64: 2, 128>}, {pipeline_mode = #tpu.pipeline_mode<synchronous>, transform_indices = @transform_2, window_bounds = array<i64: 128, 128>}, {pipeline_mode = #tpu.pipeline_mode<synchronous>, transform_indices = @transform_3, window_bounds = array<i64: 128, 128>}, {pipeline_mode = #tpu.pipeline_mode<synchronous>, transform_indices = @transform_4, window_bounds = array<i64: 1, 128>}, {pipeline_mode = #tpu.pipeline_mode<synchronous>, transform_indices = @transform_5, window_bounds = array<i64: 128, 128>}, {pipeline_mode = #tpu.pipeline_mode<synchronous>, transform_indices = @transform_6, window_bounds = array<i64: 1, 128>}, {pipeline_mode = #tpu.pipeline_mode<synchronous>, transform_indices = @transform_7, window_bounds = array<i64: 128, 128>}, {pipeline_mode = #tpu.pipeline_mode<synchronous>, transform_indices = @transform_8, window_bounds = array<i64: 1, 128>}, {transform_indices = @transform_9, window_bounds = array<i64: 2, 128>}]} {
    %c0 = arith.constant 0 : index
    %c0_0 = arith.constant 0 : index
    %0 = vector.load %arg1[%c0, %c0_0] : memref<2x128xf32, #tpu.memory_space<vmem>>, vector<2x128xf32>
    %c0_1 = arith.constant 0 : index
    %c0_2 = arith.constant 0 : index
    %1 = vector.load %arg3[%c0_1, %c0_2] : memref<128x128xf32, #tpu.memory_space<vmem>>, vector<128x128xf32>
    %cst = arith.constant dense<0.000000e+00> : vector<2x128xf32>
    %2 = tpu.matmul %0, %1, %cst {dimension_numbers = #tpu.dot_dimension_numbers<[1], [0], [0], [1], [0, 0, 1, 1], [], []>} : vector<2x128xf32>, vector<128x128xf32>, vector<2x128xf32> -> vector<2x128xf32>
    %c0_3 = arith.constant 0 : index
    %c0_4 = arith.constant 0 : index
    %3 = vector.load %arg2[%c0_3, %c0_4] : memref<2x128xf32, #tpu.memory_space<vmem>>, vector<2x128xf32>
    %c0_5 = arith.constant 0 : index
    %c0_6 = arith.constant 0 : index
    %4 = vector.load %arg4[%c0_5, %c0_6] : memref<128x128xf32, #tpu.memory_space<vmem>>, vector<128x128xf32>
    %cst_7 = arith.constant dense<0.000000e+00> : vector<2x128xf32>
    %5 = tpu.matmul %3, %4, %cst_7 {dimension_numbers = #tpu.dot_dimension_numbers<[1], [0], [0], [1], [0, 0, 1, 1], [], []>} : vector<2x128xf32>, vector<128x128xf32>, vector<2x128xf32> -> vector<2x128xf32>
    %6 = arith.addf %2, %5 : vector<2x128xf32>
    %c0_8 = arith.constant 0 : index
    %c0_9 = arith.constant 0 : index
    %7 = vector.load %arg5[%c0_8, %c0_9] : memref<1x128xf32, #tpu.memory_space<vmem>>, vector<1x128xf32>
    %8 = vector.broadcast %7 : vector<1x128xf32> to vector<2x128xf32>
    %9 = arith.addf %6, %8 : vector<2x128xf32>
    %cst_10 = arith.constant 0.000000e+00 : f32
    %10 = vector.broadcast %cst_10 : f32 to vector<2x128xf32>
    %11 = arith.maximumf %9, %10 : vector<2x128xf32>
    %c0_11 = arith.constant 0 : index
    %c0_12 = arith.constant 0 : index
    %12 = vector.load %arg6[%c0_11, %c0_12] : memref<128x128xf32, #tpu.memory_space<vmem>>, vector<128x128xf32>
    %cst_13 = arith.constant dense<0.000000e+00> : vector<2x128xf32>
    %13 = tpu.matmul %11, %12, %cst_13 {dimension_numbers = #tpu.dot_dimension_numbers<[1], [0], [0], [1], [0, 0, 1, 1], [], []>} : vector<2x128xf32>, vector<128x128xf32>, vector<2x128xf32> -> vector<2x128xf32>
    %c0_14 = arith.constant 0 : index
    %c0_15 = arith.constant 0 : index
    %14 = vector.load %arg7[%c0_14, %c0_15] : memref<1x128xf32, #tpu.memory_space<vmem>>, vector<1x128xf32>
    %15 = vector.broadcast %14 : vector<1x128xf32> to vector<2x128xf32>
    %16 = arith.addf %13, %15 : vector<2x128xf32>
    %cst_16 = arith.constant 0.000000e+00 : f32
    %17 = vector.broadcast %cst_16 : f32 to vector<2x128xf32>
    %18 = arith.maximumf %16, %17 : vector<2x128xf32>
    %c0_17 = arith.constant 0 : index
    %c0_18 = arith.constant 0 : index
    %19 = vector.load %arg8[%c0_17, %c0_18] : memref<128x128xf32, #tpu.memory_space<vmem>>, vector<128x128xf32>
    %cst_19 = arith.constant dense<0.000000e+00> : vector<2x128xf32>
    %20 = tpu.matmul %18, %19, %cst_19 {dimension_numbers = #tpu.dot_dimension_numbers<[1], [0], [0], [1], [0, 0, 1, 1], [], []>} : vector<2x128xf32>, vector<128x128xf32>, vector<2x128xf32> -> vector<2x128xf32>
    %c0_20 = arith.constant 0 : index
    %c0_21 = arith.constant 0 : index
    %21 = vector.load %arg9[%c0_20, %c0_21] : memref<1x128xf32, #tpu.memory_space<vmem>>, vector<1x128xf32>
    %22 = vector.broadcast %21 : vector<1x128xf32> to vector<2x128xf32>
    %23 = arith.addf %20, %22 : vector<2x128xf32>
    %c0_22 = arith.constant 0 : index
    %c0_23 = arith.constant 0 : index
    %24 = vector.load %arg10[%c0_22, %c0_23] : memref<2x128xf32, #tpu.memory_space<vmem>>, vector<2x128xf32>
    tpu.vector_store %arg10[%c0_22, %c0_23], %23 {strides = array<i32>} : memref<2x128xf32, #tpu.memory_space<vmem>>, vector<2x128xf32>,
    return
  }
  func.func @transform_0(%arg0: i32) -> (i32, i32) {
    %c0_i32 = arith.constant 0 : i32
    %c0_i32_0 = arith.constant 0 : i32
    return %arg0, %c0_i32 : i32, i32
  }
  func.func @transform_1(%arg0: i32) -> (i32, i32) {
    %c0_i32 = arith.constant 0 : i32
    %c0_i32_0 = arith.constant 0 : i32
    return %arg0, %c0_i32 : i32, i32
  }
  func.func @transform_2(%arg0: i32) -> (i32, i32) {
    %c0_i32 = arith.constant 0 : i32
    %c0_i32_0 = arith.constant 0 : i32
    %c0_i32_1 = arith.constant 0 : i32
    return %c0_i32, %c0_i32_0 : i32, i32
  }
  func.func @transform_3(%arg0: i32) -> (i32, i32) {
    %c0_i32 = arith.constant 0 : i32
    %c0_i32_0 = arith.constant 0 : i32
    %c0_i32_1 = arith.constant 0 : i32
    return %c0_i32, %c0_i32_0 : i32, i32
  }
  func.func @transform_4(%arg0: i32) -> (i32, i32) {
    %c0_i32 = arith.constant 0 : i32
    %c0_i32_0 = arith.constant 0 : i32
    %c0_i32_1 = arith.constant 0 : i32
    return %c0_i32, %c0_i32_0 : i32, i32
  }
  func.func @transform_5(%arg0: i32) -> (i32, i32) {
    %c0_i32 = arith.constant 0 : i32
    %c0_i32_0 = arith.constant 0 : i32
    %c0_i32_1 = arith.constant 0 : i32
    return %c0_i32, %c0_i32_0 : i32, i32
  }
  func.func @transform_6(%arg0: i32) -> (i32, i32) {
    %c0_i32 = arith.constant 0 : i32
    %c0_i32_0 = arith.constant 0 : i32
    %c0_i32_1 = arith.constant 0 : i32
    return %c0_i32, %c0_i32_0 : i32, i32
  }
  func.func @transform_7(%arg0: i32) -> (i32, i32) {
    %c0_i32 = arith.constant 0 : i32
    %c0_i32_0 = arith.constant 0 : i32
    %c0_i32_1 = arith.constant 0 : i32
    return %c0_i32, %c0_i32_0 : i32, i32
  }
  func.func @transform_8(%arg0: i32) -> (i32, i32) {
    %c0_i32 = arith.constant 0 : i32
    %c0_i32_0 = arith.constant 0 : i32
    %c0_i32_1 = arith.constant 0 : i32
    return %c0_i32, %c0_i32_0 : i32, i32
  }
  func.func @transform_9(%arg0: i32) -> (i32, i32) {
    %c0_i32 = arith.constant 0 : i32
    %c0_i32_0 = arith.constant 0 : i32
    return %arg0, %c0_i32 : i32, i32
  }
}

</mosaic_0001>

<llo_original>
// kernel: aggregate_forward.1
$region0: #{aggregate_forward.1}
  #allocation0 [shape = 'u32[]', space=smem, size = 0x4, offset = 0x4, fixed_abs, tag = 'smem constant byte address 0x4 - core index']
  #allocation1 [shape = 'u32[144,128]{1,0:T(1,128)}', space=vmem, size = 0x12000, scoped, tag = 'internal scratch']
  %s0 = inlined_call_operand.vmem [shape: f32[2,128], index: 0, kind: input, shape index: {}]
  %s1 = inlined_call_operand.vmem [shape: f32[2,128], index: 1, kind: input, shape index: {}]
  %s2 = inlined_call_operand.vmem [shape: f32[128,128], index: 2, kind: input, shape index: {}]
  %s3 = inlined_call_operand.vmem [shape: f32[128,128], index: 3, kind: input, shape index: {}]
  %s4 = inlined_call_operand.vmem [shape: f32[1,128], index: 4, kind: input, shape index: {}]
  %s5 = inlined_call_operand.vmem [shape: f32[128,128], index: 5, kind: input, shape index: {}]
  %s6 = inlined_call_operand.vmem [shape: f32[1,128], index: 6, kind: input, shape index: {}]
  %s7 = inlined_call_operand.vmem [shape: f32[128,128], index: 7, kind: input, shape index: {}]
  %s8 = inlined_call_operand.vmem [shape: f32[1,128], index: 8, kind: input, shape index: {}]
  %s9 = inlined_call_operand.hbm [shape: f32[2,128], index: 9, kind: output, shape index: {}]
  %s10 = sld [smem:[#allocation0]]
  $region46: #{aggregate_forward.1} parent=0
    _
  %s12 = ssub.s32 1, %s10
  %s13 = scalar_select 0, %s12, %s10
  $region1: #{aggregate_forward.1} parent=0
    #allocation2 [shape = 'u8[1024]{0}', space=vmem, size = 0x400, scoped, tag = 'output window, operand 0, single buffered']
    #allocation3 [shape = 's32[1]{0}', space=sflag, size = 0x4, scoped, tag = 'scoped memory for aggregate_forward.1']
    %14 = vsyncpa [#allocation3], 0
    // Predicated region
    $region2: #{aggregate_forward.1} parent=1 // pred_check
      _
    $region3: #{aggregate_forward.1} parent=1 // pred_check_branch
      %16 = sbr.rel (0) target = $region5
    $region4: #{aggregate_forward.1} parent=1 // pred_region
      _
    $region5: #{aggregate_forward.1} parent=1 // pred_fallthru
      _
    // Predicated region
    $region6: #{aggregate_forward.1} parent=1 // pred_check
      _
    $region7: #{aggregate_forward.1} parent=1 // pred_check_branch
      %18 = sbr.rel (0) target = $region9
    $region8: #{aggregate_forward.1} parent=1 // pred_region
      _
    $region9: #{aggregate_forward.1} parent=1 // pred_fallthru
      _
    // Predicated region
    $region10: #{aggregate_forward.1} parent=1 // pred_check
      _
    $region11: #{aggregate_forward.1} parent=1 // pred_check_branch
      %20 = sbr.rel (0) target = $region13
    $region12: #{aggregate_forward.1} parent=1 // pred_region
      _
    $region13: #{aggregate_forward.1} parent=1 // pred_fallthru
      _
    // Predicated region
    $region14: #{aggregate_forward.1} parent=1 // pred_check
      _
    $region15: #{aggregate_forward.1} parent=1 // pred_check_branch
      %22 = sbr.rel (0) target = $region17
    $region16: #{aggregate_forward.1} parent=1 // pred_region
      _
    $region17: #{aggregate_forward.1} parent=1 // pred_fallthru
      _
    // Predicated region
    $region18: #{aggregate_forward.1} parent=1 // pred_check
      _
    $region19: #{aggregate_forward.1} parent=1 // pred_check_branch
      %24 = sbr.rel (0) target = $region21
    $region20: #{aggregate_forward.1} parent=1 // pred_region
      _
    $region21: #{aggregate_forward.1} parent=1 // pred_fallthru
      _
    // Predicated region
    $region22: #{aggregate_forward.1} parent=1 // pred_check
      _
    $region23: #{aggregate_forward.1} parent=1 // pred_check_branch
      %26 = sbr.rel (0) target = $region25
    $region24: #{aggregate_forward.1} parent=1 // pred_region
      _
    $region25: #{aggregate_forward.1} parent=1 // pred_fallthru
      _
    // Predicated region
    $region26: #{aggregate_forward.1} parent=1 // pred_check
      _
    $region27: #{aggregate_forward.1} parent=1 // pred_check_branch
      %28 = sbr.rel (0) target = $region29
    $region28: #{aggregate_forward.1} parent=1 // pred_region
      _
    $region29: #{aggregate_forward.1} parent=1 // pred_fallthru
      _
    // Predicated region
    $region30: #{aggregate_forward.1} parent=1 // pred_check
      _
    $region31: #{aggregate_forward.1} parent=1 // pred_check_branch
      %30 = sbr.rel (0) target = $region33
    $region32: #{aggregate_forward.1} parent=1 // pred_region
      _
    $region33: #{aggregate_forward.1} parent=1 // pred_fallthru
      _
    // Predicated region
    $region34: #{aggregate_forward.1} parent=1 // pred_check
      _
    $region35: #{aggregate_forward.1} parent=1 // pred_check_branch
      %32 = sbr.rel (0) target = $region37
    $region36: #{aggregate_forward.1} parent=1 // pred_region
      _
    $region37: #{aggregate_forward.1} parent=1 // pred_fallthru
      _
    %v33 = vld [vmem:[%s0] sm:$0x3]
    %v34 = vld [vmem:[%s2] sm:$0xff]
    %v35 = vld [vmem:[%s2 + $0x8] sm:$0xff]
    %v36 = vld [vmem:[%s2 + $0x10] sm:$0xff]
    %v37 = vld [vmem:[%s2 + $0x18] sm:$0xff]
    %v38 = vld [vmem:[%s2 + $0x20] sm:$0xff]
    %v39 = vld [vmem:[%s2 + $0x28] sm:$0xff]
    %v40 = vld [vmem:[%s2 + $0x30] sm:$0xff]
    %v41 = vld [vmem:[%s2 + $0x38] sm:$0xff]
    %v42 = vld [vmem:[%s2 + $0x40] sm:$0xff]
    %v43 = vld [vmem:[%s2 + $0x48] sm:$0xff]
    %v44 = vld [vmem:[%s2 + $0x50] sm:$0xff]
    %v45 = vld [vmem:[%s2 + $0x58] sm:$0xff]
    %v46 = vld [vmem:[%s2 + $0x60] sm:$0xff]
    %v47 = vld [vmem:[%s2 + $0x68] sm:$0xff]
    %v48 = vld [vmem:[%s2 + $0x70] sm:$0xff]
    %v49 = vld [vmem:[%s2 + $0x78] sm:$0xff]
    %v50 = vld [vmem:[%s1] sm:$0x3]
    %v51 = vld [vmem:[%s3] sm:$0xff]
    %v52 = vld [vmem:[%s3 + $0x8] sm:$0xff]
    %v53 = vld [vmem:[%s3 + $0x10] sm:$0xff]
    %v54 = vld [vmem:[%s3 + $0x18] sm:$0xff]
    %v55 = vld [vmem:[%s3 + $0x20] sm:$0xff]
    %v56 = vld [vmem:[%s3 + $0x28] sm:$0xff]
    %v57 = vld [vmem:[%s3 + $0x30] sm:$0xff]
    %v58 = vld [vmem:[%s3 + $0x38] sm:$0xff]
    %v59 = vld [vmem:[%s3 + $0x40] sm:$0xff]
    %v60 = vld [vmem:[%s3 + $0x48] sm:$0xff]
    %v61 = vld [vmem:[%s3 + $0x50] sm:$0xff]
    %v62 = vld [vmem:[%s3 + $0x58] sm:$0xff]
    %v63 = vld [vmem:[%s3 + $0x60] sm:$0xff]
    %v64 = vld [vmem:[%s3 + $0x68] sm:$0xff]
    %v65 = vld [vmem:[%s3 + $0x70] sm:$0xff]
    %v66 = vld [vmem:[%s3 + $0x78] sm:$0xff]
    %67 = vmatprep.subr.mxu0 0.0
    %68 = vmatpush1.msra.mxu0 %v66
    %69 = vmatprep.subr.mxu0 0.0
    %70 = vmatpush1.msra.mxu0 %v65
    %71 = vmatprep.subr.mxu0 0.0
    %72 = vmatpush1.msra.mxu0 %v64
    %73 = vmatprep.subr.mxu0 0.0
    %74 = vmatpush1.msra.mxu0 %v63
    %75 = vmatprep.subr.mxu0 0.0
    %76 = vmatpush1.msra.mxu0 %v62
    %77 = vmatprep.subr.mxu0 0.0
    %78 = vmatpush1.msra.mxu0 %v61
    %79 = vmatprep.subr.mxu0 0.0
    %80 = vmatpush1.msra.mxu0 %v60
    %81 = vmatprep.subr.mxu0 0.0
    %82 = vmatpush1.msra.mxu0 %v59
    %83 = vmatprep.subr.mxu0 0.0
    %84 = vmatpush1.msra.mxu0 %v58
    %85 = vmatprep.subr.mxu0 0.0
    %86 = vmatpush1.msra.mxu0 %v57
    %87 = vmatprep.subr.mxu0 0.0
    %88 = vmatpush1.msra.mxu0 %v56
    %89 = vmatprep.subr.mxu0 0.0
    %90 = vmatpush1.msra.mxu0 %v55
    %91 = vmatprep.subr.mxu0 0.0
    %92 = vmatpush1.msra.mxu0 %v54
    %93 = vmatprep.subr.mxu0 0.0
    %94 = vmatpush1.msra.mxu0 %v53
    %95 = vmatprep.subr.mxu0 0.0
    %96 = vmatpush1.msra.mxu0 %v52
    %97 = vmatprep.subr.mxu0 0.0
    %98 = vmatpush1.msra.mxu0 %v51
    %99 = vmatprep.subr.mxu0 0.0
    %100 = vmatpush2.msra.mxu0 0.0
    %101 = vmatprep.subr.mxu0 0.0
    %102 = vmatpush2.msra.mxu0 0.0
    %103 = vmatprep.subr.mxu0 0.0
    %104 = vmatpush2.msra.mxu0 0.0
    %105 = vmatprep.subr.mxu0 0.0
    %106 = vmatpush2.msra.mxu0 0.0
    %107 = vmatprep.subr.mxu0 0.0
    %108 = vmatpush2.msra.mxu0 0.0
    %109 = vmatprep.subr.mxu0 0.0
    %110 = vmatpush2.msra.mxu0 0.0
    %111 = vmatprep.subr.mxu0 0.0
    %112 = vmatpush2.msra.mxu0 0.0
    %113 = vmatprep.subr.mxu0 0.0
    %114 = vmatpush2.msra.mxu0 0.0
    %115 = vmatprep.subr.mxu0 0.0
    %116 = vmatpush2.msra.mxu0 0.0
    %117 = vmatprep.subr.mxu0 0.0
    %118 = vmatpush2.msra.mxu0 0.0
    %119 = vmatprep.subr.mxu0 0.0
    %120 = vmatpush2.msra.mxu0 0.0
    %121 = vmatprep.subr.mxu0 0.0
    %122 = vmatpush2.msra.mxu0 0.0
    %123 = vmatprep.subr.mxu0 0.0
    %124 = vmatpush2.msra.mxu0 0.0
    %125 = vmatprep.subr.mxu0 0.0
    %126 = vmatpush2.msra.mxu0 0.0
    %127 = vmatprep.subr.mxu0 0.0
    %128 = vmatpush2.msra.mxu0 0.0
    %129 = vmatprep.subr.mxu0 0.0
    %130 = vmatpush2.msra.mxu0 0.0
    %131 = vmatprep.mubr.f32.mxu0 0.0
    %132 = vmatmul.mubr.f32.gmra.mxu0 %v50
    %v133 = vpop.f32.mrf.mxu0
    %v134 = vadd.f32 0.0, %v133
    %v135 = vpop.f32.mrf.mxu0
    %136 = vdwg.mxu0
    %137 = vmatprep.subr.mxu0 0.0
    %138 = vmatpush1.msra.mxu0 %v49
    %139 = vmatprep.subr.mxu0 0.0
    %140 = vmatpush1.msra.mxu0 %v48
    %141 = vmatprep.subr.mxu0 0.0
    %142 = vmatpush1.msra.mxu0 %v47
    %143 = vmatprep.subr.mxu0 0.0
    %144 = vmatpush1.msra.mxu0 %v46
    %145 = vmatprep.subr.mxu0 0.0
    %146 = vmatpush1.msra.mxu0 %v45
    %147 = vmatprep.subr.mxu0 0.0
    %148 = vmatpush1.msra.mxu0 %v44
    %149 = vmatprep.subr.mxu0 0.0
    %150 = vmatpush1.msra.mxu0 %v43
    %151 = vmatprep.subr.mxu0 0.0
    %152 = vmatpush1.msra.mxu0 %v42
    %153 = vmatprep.subr.mxu0 0.0
    %154 = vmatpush1.msra.mxu0 %v41
    %155 = vmatprep.subr.mxu0 0.0
    %156 = vmatpush1.msra.mxu0 %v40
    %157 = vmatprep.subr.mxu0 0.0
    %158 = vmatpush1.msra.mxu0 %v39
    %159 = vmatprep.subr.mxu0 0.0
    %160 = vmatpush1.msra.mxu0 %v38
    %161 = vmatprep.subr.mxu0 0.0
    %162 = vmatpush1.msra.mxu0 %v37
    %163 = vmatprep.subr.mxu0 0.0
    %164 = vmatpush1.msra.mxu0 %v36
    %165 = vmatprep.subr.mxu0 0.0
    %166 = vmatpush1.msra.mxu0 %v35
    %167 = vmatprep.subr.mxu0 0.0
    %168 = vmatpush1.msra.mxu0 %v34
    %169 = vmatprep.subr.mxu0 0.0
    %170 = vmatpush2.msra.mxu0 0.0
    %171 = vmatprep.subr.mxu0 0.0
    %172 = vmatpush2.msra.mxu0 0.0
    %173 = vmatprep.subr.mxu0 0.0
    %174 = vmatpush2.msra.mxu0 0.0
    %175 = vmatprep.subr.mxu0 0.0
    %176 = vmatpush2.msra.mxu0 0.0
    %177 = vmatprep.subr.mxu0 0.0
    %178 = vmatpush2.msra.mxu0 0.0
    %179 = vmatprep.subr.mxu0 0.0
    %180 = vmatpush2.msra.mxu0 0.0
    %181 = vmatprep.subr.mxu0 0.0
    %182 = vmatpush2.msra.mxu0 0.0
    %183 = vmatprep.subr.mxu0 0.0
    %184 = vmatpush2.msra.mxu0 0.0
    %185 = vmatprep.subr.mxu0 0.0
    %186 = vmatpush2.msra.mxu0 0.0
    %187 = vmatprep.subr.mxu0 0.0
    %188 = vmatpush2.msra.mxu0 0.0
    %189 = vmatprep.subr.mxu0 0.0
    %190 = vmatpush2.msra.mxu0 0.0
    %191 = vmatprep.subr.mxu0 0.0
    %192 = vmatpush2.msra.mxu0 0.0
    %193 = vmatprep.subr.mxu0 0.0
    %194 = vmatpush2.msra.mxu0 0.0
    %195 = vmatprep.subr.mxu0 0.0
    %196 = vmatpush2.msra.mxu0 0.0
    %197 = vmatprep.subr.mxu0 0.0
    %198 = vmatpush2.msra.mxu0 0.0
    %199 = vmatprep.subr.mxu0 0.0
    %200 = vmatpush2.msra.mxu0 0.0
    %201 = vmatprep.mubr.f32.mxu0 0.0
    %202 = vmatmul.mubr.f32.gmra.mxu0 %v33
    %v203 = vpop.f32.mrf.mxu0
    %v204 = vadd.f32 %v134, %v203
    %v205 = vpop.f32.mrf.mxu0
    %206 = vdwg.mxu0
    %v207 = vld [vmem:[%s4] sm:$0x1]
    %v209 = vlaneseq
    %v210 = vshrl.u32 %v209, 7
    %v211 = vsub.s32 0, %v210
    %v212 = vrot.slane %v207, %v211
    %v214 = vadd.f32 %v204, %v212
    %v215 = vmax.f32 %v214, 0.0
    %v216 = vld [vmem:[%s5] sm:$0xff]
    %v217 = vld [vmem:[%s5 + $0x8] sm:$0xff]
    %v218 = vld [vmem:[%s5 + $0x10] sm:$0xff]
    %v219 = vld [vmem:[%s5 + $0x18] sm:$0xff]
    %v220 = vld [vmem:[%s5 + $0x20] sm:$0xff]
    %v221 = vld [vmem:[%s5 + $0x28] sm:$0xff]
    %v222 = vld [vmem:[%s5 + $0x30] sm:$0xff]
    %v223 = vld [vmem:[%s5 + $0x38] sm:$0xff]
    %v224 = vld [vmem:[%s5 + $0x40] sm:$0xff]
    %v225 = vld [vmem:[%s5 + $0x48] sm:$0xff]
    %v226 = vld [vmem:[%s5 + $0x50] sm:$0xff]
    %v227 = vld [vmem:[%s5 + $0x58] sm:$0xff]
    %v228 = vld [vmem:[%s5 + $0x60] sm:$0xff]
    %v229 = vld [vmem:[%s5 + $0x68] sm:$0xff]
    %v230 = vld [vmem:[%s5 + $0x70] sm:$0xff]
    %v231 = vld [vmem:[%s5 + $0x78] sm:$0xff]
    %v232 = vld [vmem:[%s6] sm:$0x1]
    %v234 = vlaneseq
    %v235 = vshrl.u32 %v234, 7
    %v236 = vsub.s32 0, %v235
    %v237 = vrot.slane %v232, %v236
    %239 = vmatprep.subr.mxu0 0.0
    %240 = vmatpush1.msra.mxu0 %v231
    %241 = vmatprep.subr.mxu0 0.0
    %242 = vmatpush1.msra.mxu0 %v230
    %243 = vmatprep.subr.mxu0 0.0
    %244 = vmatpush1.msra.mxu0 %v229
    %245 = vmatprep.subr.mxu0 0.0
    %246 = vmatpush1.msra.mxu0 %v228
    %247 = vmatprep.subr.mxu0 0.0
    %248 = vmatpush1.msra.mxu0 %v227
    %249 = vmatprep.subr.mxu0 0.0
    %250 = vmatpush1.msra.mxu0 %v226
    %251 = vmatprep.subr.mxu0 0.0
    %252 = vmatpush1.msra.mxu0 %v225
    %253 = vmatprep.subr.mxu0 0.0
    %254 = vmatpush1.msra.mxu0 %v224
    %255 = vmatprep.subr.mxu0 0.0
    %256 = vmatpush1.msra.mxu0 %v223
    %257 = vmatprep.subr.mxu0 0.0
    %258 = vmatpush1.msra.mxu0 %v222
    %259 = vmatprep.subr.mxu0 0.0
    %260 = vmatpush1.msra.mxu0 %v221
    %261 = vmatprep.subr.mxu0 0.0
    %262 = vmatpush1.msra.mxu0 %v220
    %263 = vmatprep.subr.mxu0 0.0
    %264 = vmatpush1.msra.mxu0 %v219
    %265 = vmatprep.subr.mxu0 0.0
    %266 = vmatpush1.msra.mxu0 %v218
    %267 = vmatprep.subr.mxu0 0.0
    %268 = vmatpush1.msra.mxu0 %v217
    %269 = vmatprep.subr.mxu0 0.0
    %270 = vmatpush1.msra.mxu0 %v216
    %271 = vmatprep.subr.mxu0 0.0
    %272 = vmatpush2.msra.mxu0 0.0
    %273 = vmatprep.subr.mxu0 0.0
    %274 = vmatpush2.msra.mxu0 0.0
    %275 = vmatprep.subr.mxu0 0.0
    %276 = vmatpush2.msra.mxu0 0.0
    %277 = vmatprep.subr.mxu0 0.0
    %278 = vmatpush2.msra.mxu0 0.0
    %279 = vmatprep.subr.mxu0 0.0
    %280 = vmatpush2.msra.mxu0 0.0
    %281 = vmatprep.subr.mxu0 0.0
    %282 = vmatpush2.msra.mxu0 0.0
    %283 = vmatprep.subr.mxu0 0.0
    %284 = vmatpush2.msra.mxu0 0.0
    %285 = vmatprep.subr.mxu0 0.0
    %286 = vmatpush2.msra.mxu0 0.0
    %287 = vmatprep.subr.mxu0 0.0
    %288 = vmatpush2.msra.mxu0 0.0
    %289 = vmatprep.subr.mxu0 0.0
    %290 = vmatpush2.msra.mxu0 0.0
    %291 = vmatprep.subr.mxu0 0.0
    %292 = vmatpush2.msra.mxu0 0.0
    %293 = vmatprep.subr.mxu0 0.0
    %294 = vmatpush2.msra.mxu0 0.0
    %295 = vmatprep.subr.mxu0 0.0
    %296 = vmatpush2.msra.mxu0 0.0
    %297 = vmatprep.subr.mxu0 0.0
    %298 = vmatpush2.msra.mxu0 0.0
    %299 = vmatprep.subr.mxu0 0.0
    %300 = vmatpush2.msra.mxu0 0.0
    %301 = vmatprep.subr.mxu0 0.0
    %302 = vmatpush2.msra.mxu0 0.0
    %303 = vmatprep.mubr.f32.mxu0 0.0
    %304 = vmatmul.mubr.f32.gmra.mxu0 %v215
    %v305 = vpop.f32.mrf.mxu0
    %v306 = vadd.f32 %v237, %v305
    %v307 = vpop.f32.mrf.mxu0
    %308 = vdwg.mxu0
    %v309 = vmax.f32 %v306, 0.0
    %v310 = vld [vmem:[%s7] sm:$0xff]
    %v311 = vld [vmem:[%s7 + $0x8] sm:$0xff]
    %v312 = vld [vmem:[%s7 + $0x10] sm:$0xff]
    %v313 = vld [vmem:[%s7 + $0x18] sm:$0xff]
    %v314 = vld [vmem:[%s7 + $0x20] sm:$0xff]
    %v315 = vld [vmem:[%s7 + $0x28] sm:$0xff]
    %v316 = vld [vmem:[%s7 + $0x30] sm:$0xff]
    %v317 = vld [vmem:[%s7 + $0x38] sm:$0xff]
    %v318 = vld [vmem:[%s7 + $0x40] sm:$0xff]
    %v319 = vld [vmem:[%s7 + $0x48] sm:$0xff]
    %v320 = vld [vmem:[%s7 + $0x50] sm:$0xff]
    %v321 = vld [vmem:[%s7 + $0x58] sm:$0xff]
    %v322 = vld [vmem:[%s7 + $0x60] sm:$0xff]
    %v323 = vld [vmem:[%s7 + $0x68] sm:$0xff]
    %v324 = vld [vmem:[%s7 + $0x70] sm:$0xff]
    %v325 = vld [vmem:[%s7 + $0x78] sm:$0xff]
    %v326 = vld [vmem:[%s8] sm:$0x1]
    %v328 = vlaneseq
    %v329 = vshrl.u32 %v328, 7
    %v330 = vsub.s32 0, %v329
    %v331 = vrot.slane %v326, %v330
    %333 = vmatprep.subr.mxu0 0.0
    %334 = vmatpush1.msra.mxu0 %v325
    %335 = vmatprep.subr.mxu0 0.0
    %336 = vmatpush1.msra.mxu0 %v324
    %337 = vmatprep.subr.mxu0 0.0
    %338 = vmatpush1.msra.mxu0 %v323
    %339 = vmatprep.subr.mxu0 0.0
    %340 = vmatpush1.msra.mxu0 %v322
    %341 = vmatprep.subr.mxu0 0.0
    %342 = vmatpush1.msra.mxu0 %v321
    %343 = vmatprep.subr.mxu0 0.0
    %344 = vmatpush1.msra.mxu0 %v320
    %345 = vmatprep.subr.mxu0 0.0
    %346 = vmatpush1.msra.mxu0 %v319
    %347 = vmatprep.subr.mxu0 0.0
    %348 = vmatpush1.msra.mxu0 %v318
    %349 = vmatprep.subr.mxu0 0.0
    %350 = vmatpush1.msra.mxu0 %v317
    %351 = vmatprep.subr.mxu0 0.0
    %352 = vmatpush1.msra.mxu0 %v316
    %353 = vmatprep.subr.mxu0 0.0
    %354 = vmatpush1.msra.mxu0 %v315
    %355 = vmatprep.subr.mxu0 0.0
    %356 = vmatpush1.msra.mxu0 %v314
    %357 = vmatprep.subr.mxu0 0.0
    %358 = vmatpush1.msra.mxu0 %v313
    %359 = vmatprep.subr.mxu0 0.0
    %360 = vmatpush1.msra.mxu0 %v312
    %361 = vmatprep.subr.mxu0 0.0
    %362 = vmatpush1.msra.mxu0 %v311
    %363 = vmatprep.subr.mxu0 0.0
    %364 = vmatpush1.msra.mxu0 %v310
    %365 = vmatprep.subr.mxu0 0.0
    %366 = vmatpush2.msra.mxu0 0.0
    %367 = vmatprep.subr.mxu0 0.0
    %368 = vmatpush2.msra.mxu0 0.0
    %369 = vmatprep.subr.mxu0 0.0
    %370 = vmatpush2.msra.mxu0 0.0
    %371 = vmatprep.subr.mxu0 0.0
    %372 = vmatpush2.msra.mxu0 0.0
    %373 = vmatprep.subr.mxu0 0.0
    %374 = vmatpush2.msra.mxu0 0.0
    %375 = vmatprep.subr.mxu0 0.0
    %376 = vmatpush2.msra.mxu0 0.0
    %377 = vmatprep.subr.mxu0 0.0
    %378 = vmatpush2.msra.mxu0 0.0
    %379 = vmatprep.subr.mxu0 0.0
    %380 = vmatpush2.msra.mxu0 0.0
    %381 = vmatprep.subr.mxu0 0.0
    %382 = vmatpush2.msra.mxu0 0.0
    %383 = vmatprep.subr.mxu0 0.0
    %384 = vmatpush2.msra.mxu0 0.0
    %385 = vmatprep.subr.mxu0 0.0
    %386 = vmatpush2.msra.mxu0 0.0
    %387 = vmatprep.subr.mxu0 0.0
    %388 = vmatpush2.msra.mxu0 0.0
    %389 = vmatprep.subr.mxu0 0.0
    %390 = vmatpush2.msra.mxu0 0.0
    %391 = vmatprep.subr.mxu0 0.0
    %392 = vmatpush2.msra.mxu0 0.0
    %393 = vmatprep.subr.mxu0 0.0
    %394 = vmatpush2.msra.mxu0 0.0
    %395 = vmatprep.subr.mxu0 0.0
    %396 = vmatpush2.msra.mxu0 0.0
    %397 = vmatprep.mubr.f32.mxu0 0.0
    %398 = vmatmul.mubr.f32.gmra.mxu0 %v309
    %v399 = vpop.f32.mrf.mxu0
    %v400 = vadd.f32 %v331, %v399
    %v401 = vpop.f32.mrf.mxu0
    %402 = vdwg.mxu0
    %403 = vst [vmem:[#allocation2] sm:$0x3] %v400
    // Predicated region
    $region38: #{aggregate_forward.1} parent=1 // pred_check
      _
    $region39: #{aggregate_forward.1} parent=1 // pred_check_branch
      %405 = sbr.rel (0) target = $region41
    $region40: #{aggregate_forward.1} parent=1 // pred_region
      %s407 = ssub.s32 32, 32
      %408 = vsyncadd [#allocation3], %s407
      %s410 = sshll.u32 [#allocation2], 4
      %s411 = int_to_ptr.vmem [resolvable:$true] %s410
      %413 = dma.vmem_to_hbm [thread:$0]  %s411, 32, %s9, [#allocation3]
    $region41: #{aggregate_forward.1} parent=1 // pred_fallthru
      _
    // Predicated region
    $region42: #{aggregate_forward.1} parent=1 // pred_check
      _
    $region43: #{aggregate_forward.1} parent=1 // pred_check_branch
      %415 = sbr.rel (0) target = $region45
    $region44: #{aggregate_forward.1} parent=1 // pred_region
      %416 = dma.done [#allocation3], 32
    $region45: #{aggregate_forward.1} parent=1 // pred_fallthru
      _
    %417 = vsyncpa [#allocation3], 1

</llo_original>
